<compile_context>
chip_gen: v5e
topology: v5e:2x2
jax: 0.10.0
libtpu: 0.0.40
codegen_flags: <defaults>
</compile_context>

<pallas_src>
import functools

import jax
import jax.numpy as jnp
from jax.experimental import pallas as pl
from jax.experimental.pallas import tpu as pltpu


def _round_up(n, m):
    return ((n + m - 1) // m) * m


def _freq_encode_kernel(x_ref, o_ref, *, degree, input_dim, lane_chunk):
    # x_ref: (input_dim,  TILE_B) float32 in VMEM  (batch on the lane axis)
    # o_ref: (output_dim, TILE_B) float32 in VMEM
    tile_b = x_ref.shape[1]
    for start in range(0, tile_b, lane_chunk):
        stop = min(start + lane_chunk, tile_b)
        x = x_ref[:, start:stop]                      # (input_dim, chunk), lane-dense
        o_ref[0:input_dim, start:stop] = x
        s = c = None
        for f in range(degree):
            if f % 2 == 0:
                y = x if f == 0 else x * jnp.float32(2.0 ** f)
                s = jnp.sin(y)                        # EUP, full-lane vregs
                c = jnp.cos(y)
            else:
                # One double-angle step (VPU only): sin(2y)=2sc, cos(2y)=c^2-s^2
                s, c = 2.0 * s * c, (c - s) * (c + s)
            base = input_dim * (1 + 2 * f)
            o_ref[base:base + input_dim, start:stop] = s
            o_ref[base + input_dim:base + 2 * input_dim, start:stop] = c


def freq_encode_pallas(inputs, degree=4, *, tile_b=8192, lane_chunk=1024):
    """inputs: (..., input_dim). Returns (..., input_dim * (1 + 2*degree)), float32."""
    inputs = jnp.asarray(inputs, dtype=jnp.float32)
    prefix_shape = inputs.shape[:-1]
    input_dim = inputs.shape[-1]
    output_dim = input_dim * (1 + 2 * degree)

    x = inputs.reshape(-1, input_dim)
    B = x.shape[0]
    if B == 0:
        return jnp.zeros(prefix_shape + (output_dim,), jnp.float32)

    # Feature-major layout: batch -> lanes (dense vregs for EUP and stores).
    xt = x.T                                           # (input_dim, B)

    # Lane-tile size: 128-aligned, capped by the user tile, and small enough to
    # keep >= 2 grid steps when B allows (v7x megacore).  For tiny B use the
    # full array as a single block (lane dim == full dim is always legal).
    if B <= 128:
        tb = B
    else:
        tb = max(128, min(_round_up(tile_b, 128),
                          _round_up(pl.cdiv(B, 2), 128)))
    chunk = max(1, min(lane_chunk, tb))
    grid = (pl.cdiv(B, tb),)

    out_t = pl.pallas_call(
        functools.partial(_freq_encode_kernel, degree=degree,
                          input_dim=input_dim, lane_chunk=chunk),
        out_shape=jax.ShapeDtypeStruct((output_dim, B), jnp.float32),
        grid_spec=pltpu.PrefetchScalarGridSpec(
            num_scalar_prefetch=0,
            grid=grid,
            in_specs=[pl.BlockSpec((input_dim, tb), lambda i: (0, i))],
            out_specs=pl.BlockSpec((output_dim, tb), lambda i: (0, i)),
        ),
        compiler_params=pltpu.CompilerParams(
            dimension_semantics=("parallel",)),
    )(xt)

    out = out_t.T                                      # (B, output_dim)
    return out.reshape(prefix_shape + (output_dim,))


class FreqEncoderPallas:
    """Mirror of the PyTorch FreqEncoder module (no learnable params)."""

    def __init__(self, input_dim=3, degree=4):
        self.input_dim = input_dim
        self.degree = degree
        self.output_dim = input_dim + input_dim * 2 * degree

    def __call__(self, inputs, **kwargs):
        return freq_encode_pallas(inputs, self.degree)


def _reference_freq_encode(inputs, degree):
    """Pure-JAX reference matching the CUDA kernel layout."""
    inputs = jnp.asarray(inputs, dtype=jnp.float32)
    pieces = [inputs]
    for f in range(degree):
        scaled = inputs * (2.0 ** f)
        pieces.append(jnp.sin(scaled))
        pieces.append(jnp.cos(scaled))
    return jnp.concatenate(pieces, axis=-1)


if __name__ == "__main__":
    key = jax.random.PRNGKey(0)
    k1, k2 = jax.random.split(key)

    enc = FreqEncoderPallas(input_dim=3, degree=4)

    # Small NeRF-style input: (batch, n_points, 3) coords in [-1, 1].
    x_small = jax.random.uniform(k1, (2, 4, 3), minval=-1.0, maxval=1.0)
    out_small = jax.block_until_ready(enc(x_small))
    assert out_small.shape == (2, 4, enc.output_dim), out_small.shape
    ref_small = _reference_freq_encode(x_small, enc.degree)
    if not jnp.allclose(out_small, ref_small, atol=1e-5, rtol=1e-5):
        raise AssertionError("Pallas output mismatch vs reference (small)")

    # Ragged multi-block batch to exercise the tiled / partial-block path.
    x_big = jax.random.uniform(k2, (4100, 3), minval=-1.0, maxval=1.0)
    out_big = jax.block_until_ready(freq_encode_pallas(x_big, degree=4))
    ref_big = _reference_freq_encode(x_big, 4)
    if not jnp.allclose(out_big, ref_big, atol=1e-5, rtol=1e-5):
        raise AssertionError("Pallas output mismatch vs reference (big)")

    print("KERNEL_OK")
</pallas_src>

<mosaic_0001>
module attributes {stable_mosaic.version = 11 : i64} {
  func.func @_freq_encode_kernel(%arg0: i32, %arg1: memref<3x8xf32, #tpu.memory_space<vmem>>, %arg2: memref<27x8xf32, #tpu.memory_space<vmem>>) attributes {dimension_semantics = [#tpu.dimension_semantics<parallel>], iteration_bounds = array<i64: 1>, scalar_prefetch = 0 : i64, scratch_operands = 0 : i64, tpu.core_type = #tpu.core_type<tc>, window_params = [{transform_indices = @transform_0, window_bounds = array<i64: 3, 8>}, {transform_indices = @transform_1, window_bounds = array<i64: 27, 8>}]} {
    %c0 = arith.constant 0 : index
    %c0_0 = arith.constant 0 : index
    %0 = vector.load %arg1[%c0, %c0_0] : memref<3x8xf32, #tpu.memory_space<vmem>>, vector<3x8xf32>
    %c0_1 = arith.constant 0 : index
    %c0_2 = arith.constant 0 : index
    %1 = vector.load %arg2[%c0_1, %c0_2] : memref<27x8xf32, #tpu.memory_space<vmem>>, vector<3x8xf32>
    tpu.vector_store %arg2[%c0_1, %c0_2], %0 {strides = array<i32>} : memref<27x8xf32, #tpu.memory_space<vmem>>, vector<3x8xf32>,
    %2 = math.sin %0 : vector<3x8xf32>
    %3 = math.cos %0 : vector<3x8xf32>
    %c3 = arith.constant 3 : index
    %c0_3 = arith.constant 0 : index
    %4 = vector.load %arg2[%c3, %c0_3] : memref<27x8xf32, #tpu.memory_space<vmem>>, vector<3x8xf32>
    tpu.vector_store %arg2[%c3, %c0_3], %2 {strides = array<i32>} : memref<27x8xf32, #tpu.memory_space<vmem>>, vector<3x8xf32>,
    %c6 = arith.constant 6 : index
    %c0_4 = arith.constant 0 : index
    %5 = vector.load %arg2[%c6, %c0_4] : memref<27x8xf32, #tpu.memory_space<vmem>>, vector<3x8xf32>
    tpu.vector_store %arg2[%c6, %c0_4], %3 {strides = array<i32>} : memref<27x8xf32, #tpu.memory_space<vmem>>, vector<3x8xf32>,
    %cst = arith.constant 2.000000e+00 : f32
    %6 = vector.broadcast %cst : f32 to vector<3x8xf32>
    %7 = arith.mulf %6, %2 : vector<3x8xf32>
    %8 = arith.mulf %7, %3 : vector<3x8xf32>
    %9 = arith.subf %3, %2 : vector<3x8xf32>
    %10 = arith.addf %3, %2 : vector<3x8xf32>
    %11 = arith.mulf %9, %10 : vector<3x8xf32>
    %c9 = arith.constant 9 : index
    %c0_5 = arith.constant 0 : index
    %12 = vector.load %arg2[%c9, %c0_5] : memref<27x8xf32, #tpu.memory_space<vmem>>, vector<3x8xf32>
    tpu.vector_store %arg2[%c9, %c0_5], %8 {strides = array<i32>} : memref<27x8xf32, #tpu.memory_space<vmem>>, vector<3x8xf32>,
    %c12 = arith.constant 12 : index
    %c0_6 = arith.constant 0 : index
    %13 = vector.load %arg2[%c12, %c0_6] : memref<27x8xf32, #tpu.memory_space<vmem>>, vector<3x8xf32>
    tpu.vector_store %arg2[%c12, %c0_6], %11 {strides = array<i32>} : memref<27x8xf32, #tpu.memory_space<vmem>>, vector<3x8xf32>,
    %cst_7 = arith.constant 4.000000e+00 : f32
    %14 = vector.broadcast %cst_7 : f32 to vector<3x8xf32>
    %15 = arith.mulf %0, %14 : vector<3x8xf32>
    %16 = math.sin %15 : vector<3x8xf32>
    %17 = math.cos %15 : vector<3x8xf32>
    %c15 = arith.constant 15 : index
    %c0_8 = arith.constant 0 : index
    %18 = vector.load %arg2[%c15, %c0_8] : memref<27x8xf32, #tpu.memory_space<vmem>>, vector<3x8xf32>
    tpu.vector_store %arg2[%c15, %c0_8], %16 {strides = array<i32>} : memref<27x8xf32, #tpu.memory_space<vmem>>, vector<3x8xf32>,
    %c18 = arith.constant 18 : index
    %c0_9 = arith.constant 0 : index
    %19 = vector.load %arg2[%c18, %c0_9] : memref<27x8xf32, #tpu.memory_space<vmem>>, vector<3x8xf32>
    tpu.vector_store %arg2[%c18, %c0_9], %17 {strides = array<i32>} : memref<27x8xf32, #tpu.memory_space<vmem>>, vector<3x8xf32>,
    %cst_10 = arith.constant 2.000000e+00 : f32
    %20 = vector.broadcast %cst_10 : f32 to vector<3x8xf32>
    %21 = arith.mulf %20, %16 : vector<3x8xf32>
    %22 = arith.mulf %21, %17 : vector<3x8xf32>
    %23 = arith.subf %17, %16 : vector<3x8xf32>
    %24 = arith.addf %17, %16 : vector<3x8xf32>
    %25 = arith.mulf %23, %24 : vector<3x8xf32>
    %c21 = arith.constant 21 : index
    %c0_11 = arith.constant 0 : index
    %26 = vector.load %arg2[%c21, %c0_11] : memref<27x8xf32, #tpu.memory_space<vmem>>, vector<3x8xf32>
    tpu.vector_store %arg2[%c21, %c0_11], %22 {strides = array<i32>} : memref<27x8xf32, #tpu.memory_space<vmem>>, vector<3x8xf32>,
    %c24 = arith.constant 24 : index
    %c0_12 = arith.constant 0 : index
    %27 = vector.load %arg2[%c24, %c0_12] : memref<27x8xf32, #tpu.memory_space<vmem>>, vector<3x8xf32>
    tpu.vector_store %arg2[%c24, %c0_12], %25 {strides = array<i32>} : memref<27x8xf32, #tpu.memory_space<vmem>>, vector<3x8xf32>,
    return
  }
  func.func @transform_0(%arg0: i32) -> (i32, i32) {
    %c0_i32 = arith.constant 0 : i32
    %c0_i32_0 = arith.constant 0 : i32
    return %c0_i32, %arg0 : i32, i32
  }
  func.func @transform_1(%arg0: i32) -> (i32, i32) {
    %c0_i32 = arith.constant 0 : i32
    %c0_i32_0 = arith.constant 0 : i32
    return %c0_i32, %arg0 : i32, i32
  }
}

</mosaic_0001>

<llo_original>
// kernel: tpu_custom_call.1
$region0: #{tpu_custom_call.1}
  #allocation0 [shape = 'u32[]', space=smem, size = 0x4, offset = 0x4, fixed_abs, tag = 'smem constant byte address 0x4 - core index']
  #allocation1 [shape = 'u32[72,128]{1,0:T(1,128)}', space=vmem, size = 0x9000, scoped, tag = 'internal scratch']
  %s0 = inlined_call_operand.hbm [shape: f32[3,8], index: 0, kind: input, shape index: {}]
  %s1 = inlined_call_operand.vmem [shape: f32[27,8], index: 1, kind: output, shape index: {}]
  %s2 = sld [smem:[#allocation0]]
  $region18: #{tpu_custom_call.1} parent=0
    _
  %s4 = ssub.s32 1, %s2
  %s5 = scalar_select 0, %s4, %s2
  $region1: #{tpu_custom_call.1} parent=0
    #allocation2 [shape = 'u8[2048]{0}', space=vmem, size = 0x800, scoped, tag = 'input window, operand 0, single buffered']
    #allocation3 [shape = 's32[1]{0}', space=sflag, size = 0x4, scoped, tag = 'scoped memory for tpu_custom_call.1']
    %6 = vsyncpa [#allocation3], 0
    // Predicated region
    $region2: #{tpu_custom_call.1} parent=1 // pred_check
      _
    $region3: #{tpu_custom_call.1} parent=1 // pred_check_branch
      %8 = sbr.rel (0) target = $region5
    $region4: #{tpu_custom_call.1} parent=1 // pred_region
      %10 = vsyncadd [#allocation3], 0
      %s12 = sshll.u32 %s0, 4
      %s13 = int_to_ptr.hbm [resolvable:$true] %s12
      %s14 = sshll.u32 [#allocation2], 4
      %s15 = int_to_ptr.vmem [resolvable:$true] %s14
      %17 = dma.hbm_to_vmem [thread:$0]  %s13, 64, %s15, [#allocation3]
    $region5: #{tpu_custom_call.1} parent=1 // pred_fallthru
      _
    // Predicated region
    $region6: #{tpu_custom_call.1} parent=1 // pred_check
      _
    $region7: #{tpu_custom_call.1} parent=1 // pred_check_branch
      %19 = sbr.rel (0) target = $region9
    $region8: #{tpu_custom_call.1} parent=1 // pred_region
      %21 = dma.done [#allocation3], 64
    $region9: #{tpu_custom_call.1} parent=1 // pred_fallthru
      _
    %v22 = vld [vmem:[#allocation2] sm:$0x7]
    %vm23 = vcmask 59392
    %24 = vst.msk [vmem:[%s1] sm:$0x7] %vm23, %v22
    %v25 = vand.u32 2147483647, %v22
    %vm26 = vcmp.le.f32.partialorder %v25, 0.7853982
    %vm27 = vcmp.lt.s32.totalorder %v22, 0
    %v28 = vand.u32 %v22, 2139095040
    %v29 = vshrl.u32 %v28, 23
    %v30 = vsub.s32 %v29, 127
    %v31 = vand.u32 2147483647, %v22
    %v32 = vand.u32 %v31, 8388607
    %v33 = vor.u32 %v32, 8388608
    %v34 = vsub.s32 0, %v33
    %v35 = vadd.s32 %v30, 1
    %vm36 = vcmp.gt.s32.totalorder %v35, 0
    %v37 = vsel %vm36, %v35, 0
    %v38 = vshrl.u32 %v37, 5
    %v39 = vand.u32 %v37, 31
    %v40 = vsub.s32 32, %v39
    %v41 = vshrl.u32 683565275, %v40
    %v42 = vshll.u32 683565275, %v39
    %v43 = vshrl.u32 2475754826, %v40
    %v44 = vor.u32 %v42, %v43
    %v45 = vshll.u32 2475754826, %v39
    %v46 = vshrl.u32 2131351028, %v40
    %v47 = vor.u32 %v45, %v46
    %v48 = vshll.u32 2131351028, %v39
    %v49 = vshrl.u32 2102212464, %v40
    %v50 = vor.u32 %v48, %v49
    %v51 = vshll.u32 2102212464, %v39
    %v52 = vshrl.u32 920167782, %v40
    %v53 = vor.u32 %v51, %v52
    %v54 = vshll.u32 920167782, %v39
    %v55 = vshrl.u32 1326507024, %v40
    %v56 = vor.u32 %v54, %v55
    %vm57 = vcmp.lt.s32.totalorder %v38, 1
    %vm58 = vcmp.lt.s32.totalorder %v38, 2
    %vm59 = vcmp.lt.s32.totalorder %v38, 3
    %vm60 = vcmp.lt.s32.totalorder %v38, 4
    %v61 = vsel %vm57, %v41, %v44
    %v62 = vsel %vm60, %v50, 2102212464
    %v63 = vsel %vm59, %v47, %v62
    %v64 = vsel %vm58, %v61, %v63
    %v65 = vsel %vm57, %v44, %v47
    %v66 = vsel %vm60, %v53, 920167782
    %v67 = vsel %vm59, %v50, %v66
    %v68 = vsel %vm58, %v65, %v67
    %v69 = vsel %vm57, %v47, %v50
    %v70 = vsel %vm60, %v56, 1326507024
    %v71 = vsel %vm59, %v53, %v70
    %v72 = vsel %vm58, %v69, %v71
    %v73 = vshll.u32 %v33, 8
    %v74 = vand.u32 %v73, 65535
    %v75 = vshrl.u32 %v73, 16
    %v76 = vand.u32 %v72, 65535
    %v77 = vshrl.u32 %v72, 16
    %v78 = vmul.u32 %v74, %v76
    %v79 = vmul.u32 %v74, %v77
    %v80 = vmul.u32 %v75, %v76
    %v81 = vmul.u32 %v75, %v77
    %v82 = vshll.u32 %v79, 16
    %v83 = vshrl.u32 %v79, 16
    %v84 = vshll.u32 %v80, 16
    %v85 = vshrl.u32 %v80, 16
    %vm86 = vc.u32 %v78, %v82
    %v87 = vsel %vm86, 1, 0
    %v88 = vadd.s32 %v78, %v82
    %v89 = vadd.s32 %v81, %v87
    %vm90 = vc.u32 %v88, %v84
    %v91 = vsel %vm90, 1, 0
    %v92 = vadd.s32 %v88, %v84
    %v93 = vadd.s32 %v89, %v91
    %v94 = vadd.s32 %v93, %v83
    %v95 = vadd.s32 %v94, %v85
    %v96 = vand.u32 %v73, 65535
    %v97 = vshrl.u32 %v73, 16
    %v98 = vand.u32 %v68, 65535
    %v99 = vshrl.u32 %v68, 16
    %v100 = vmul.u32 %v96, %v98
    %v101 = vmul.u32 %v96, %v99
    %v102 = vmul.u32 %v97, %v98
    %v103 = vmul.u32 %v97, %v99
    %v104 = vshll.u32 %v101, 16
    %v105 = vshrl.u32 %v101, 16
    %v106 = vshll.u32 %v102, 16
    %v107 = vshrl.u32 %v102, 16
    %vm108 = vc.u32 %v100, %v104
    %v109 = vsel %vm108, 1, 0
    %v110 = vadd.s32 %v100, %v104
    %v111 = vadd.s32 %v103, %v109
    %vm112 = vc.u32 %v110, %v106
    %v113 = vsel %vm112, 1, 0
    %v114 = vadd.s32 %v110, %v106
    %v115 = vadd.s32 %v111, %v113
    %v116 = vadd.s32 %v115, %v105
    %v117 = vadd.s32 %v116, %v107
    %v118 = vmul.u32 %v73, %v64
    %v119 = vadd.s32 %v95, %v114
    %vm120 = vc.u32 %v95, %v114
    %v121 = vadd.s32 %v117, 1
    %v122 = vsel %vm120, %v121, %v117
    %v123 = vadd.s32 %v118, %v122
    %v124 = vadd.s32 %v123, 536870912
    %v125 = vshrl.u32 %v124, 30
    %v126 = vshll.u32 %v125, 30
    %v127 = vsub.s32 %v123, %v126
    %vm128 = vcmp.lt.s32.totalorder %v127, 0
    %v129 = vsub.s32 0, %v127
    %v130 = vsel %vm128, %v129, %v127
    %v131 = vclz %v130
    %v132 = vsub.s32 %v131, 2
    %vm133 = vcmp.gt.s32.totalorder 0, %v132
    %v134 = vsel %vm133, 0, %v132
    %v135 = vsub.s32 32, %v134
    %v136 = vshll.u32 %v127, %v134
    %v137 = vshrl.u32 %v119, %v135
    %v138 = vor.u32 %v136, %v137
    %v139 = vsub.s32 4294967266, %v134
    %v140 = vadd.s32 %v139, 127
    %v141 = vshll.u32 %v140, 23
    %v142 = vor.u32 4788187, %v141
    %v143 = vand.u32 2147483647, %v142
    %v145 = vcvt.s32.f32 %v138
    %v146 = vmul.f32 %v145, %v143
    %v147 = vxor.u32 %v146, 2147483648
    %v148 = vsel %vm27, %v147, %v146
    %v149 = vsub.s32 4, %v125
    %v150 = vsel %vm27, %v149, %v125
    %v151 = vsel %vm26, %v22, %v148
    %v152 = vsel %vm26, 0, %v150
    %v153 = vmul.f32 %v151, %v151
    %v154 = vmul.f32 %v153, -0.001358992
    %v155 = vadd.f32 %v154, 0.041655596
    %v156 = vmul.f32 %v153, %v155
    %v157 = vadd.f32 %v156, -0.4999988
    %v158 = vmul.f32 %v153, %v157
    %v159 = vadd.f32 1.0, %v158
    %v160 = vmul.f32 %v151, %v151
    %v161 = vmul.f32 %v160, -0.00019511016
    %v162 = vadd.f32 %v161, 0.008332121
    %v163 = vmul.f32 %v160, %v162
    %v164 = vadd.f32 %v163, -0.16666654
    %v165 = vmul.f32 %v160, %v164
    %v166 = vadd.f32 %v165, 1.0
    %v167 = vmul.f32 %v166, %v151
    %vm168 = vweird.f32 %v22
    %v169 = vadd.s32 %v152, 3
    %v170 = vand.u32 %v169, 3
    %vm171 = vcmp.lt.s32.totalorder %v170, 2
    %vm172 = vcmp.eq.s32.totalorder %v170, 0
    %v173 = vxor.u32 %v167, 2147483648
    %v174 = vsel %vm172, %v159, %v173
    %vm175 = vcmp.eq.s32.totalorder %v170, 2
    %v176 = vxor.u32 %v159, 2147483648
    %v177 = vsel %vm175, %v176, %v167
    %v178 = vsel %vm171, %v174, %v177
    %v179 = vsel %vm168, nan, %v178
    %v180 = vand.u32 2147483647, %v22
    %vm181 = vcmp.le.f32.partialorder %v180, 0.7853982
    %vm182 = vcmp.lt.s32.totalorder %v22, 0
    %v183 = vand.u32 %v22, 2139095040
    %v184 = vshrl.u32 %v183, 23
    %v185 = vsub.s32 %v184, 127
    %v186 = vand.u32 2147483647, %v22
    %v187 = vand.u32 %v186, 8388607
    %v188 = vor.u32 %v187, 8388608
    %v189 = vsub.s32 0, %v188
    %v190 = vadd.s32 %v185, 1
    %vm191 = vcmp.gt.s32.totalorder %v190, 0
    %v192 = vsel %vm191, %v190, 0
    %v193 = vshrl.u32 %v192, 5
    %v194 = vand.u32 %v192, 31
    %v195 = vsub.s32 32, %v194
    %v196 = vshrl.u32 683565275, %v195
    %v197 = vshll.u32 683565275, %v194
    %v198 = vshrl.u32 2475754826, %v195
    %v199 = vor.u32 %v197, %v198
    %v200 = vshll.u32 2475754826, %v194
    %v201 = vshrl.u32 2131351028, %v195
    %v202 = vor.u32 %v200, %v201
    %v203 = vshll.u32 2131351028, %v194
    %v204 = vshrl.u32 2102212464, %v195
    %v205 = vor.u32 %v203, %v204
    %v206 = vshll.u32 2102212464, %v194
    %v207 = vshrl.u32 920167782, %v195
    %v208 = vor.u32 %v206, %v207
    %v209 = vshll.u32 920167782, %v194
    %v210 = vshrl.u32 1326507024, %v195
    %v211 = vor.u32 %v209, %v210
    %vm212 = vcmp.lt.s32.totalorder %v193, 1
    %vm213 = vcmp.lt.s32.totalorder %v193, 2
    %vm214 = vcmp.lt.s32.totalorder %v193, 3
    %vm215 = vcmp.lt.s32.totalorder %v193, 4
    %v216 = vsel %vm212, %v196, %v199
    %v217 = vsel %vm215, %v205, 2102212464
    %v218 = vsel %vm214, %v202, %v217
    %v219 = vsel %vm213, %v216, %v218
    %v220 = vsel %vm212, %v199, %v202
    %v221 = vsel %vm215, %v208, 920167782
    %v222 = vsel %vm214, %v205, %v221
    %v223 = vsel %vm213, %v220, %v222
    %v224 = vsel %vm212, %v202, %v205
    %v225 = vsel %vm215, %v211, 1326507024
    %v226 = vsel %vm214, %v208, %v225
    %v227 = vsel %vm213, %v224, %v226
    %v228 = vshll.u32 %v188, 8
    %v229 = vand.u32 %v228, 65535
    %v230 = vshrl.u32 %v228, 16
    %v231 = vand.u32 %v227, 65535
    %v232 = vshrl.u32 %v227, 16
    %v233 = vmul.u32 %v229, %v231
    %v234 = vmul.u32 %v229, %v232
    %v235 = vmul.u32 %v230, %v231
    %v236 = vmul.u32 %v230, %v232
    %v237 = vshll.u32 %v234, 16
    %v238 = vshrl.u32 %v234, 16
    %v239 = vshll.u32 %v235, 16
    %v240 = vshrl.u32 %v235, 16
    %vm241 = vc.u32 %v233, %v237
    %v242 = vsel %vm241, 1, 0
    %v243 = vadd.s32 %v233, %v237
    %v244 = vadd.s32 %v236, %v242
    %vm245 = vc.u32 %v243, %v239
    %v246 = vsel %vm245, 1, 0
    %v247 = vadd.s32 %v243, %v239
    %v248 = vadd.s32 %v244, %v246
    %v249 = vadd.s32 %v248, %v238
    %v250 = vadd.s32 %v249, %v240
    %v251 = vand.u32 %v228, 65535
    %v252 = vshrl.u32 %v228, 16
    %v253 = vand.u32 %v223, 65535
    %v254 = vshrl.u32 %v223, 16
    %v255 = vmul.u32 %v251, %v253
    %v256 = vmul.u32 %v251, %v254
    %v257 = vmul.u32 %v252, %v253
    %v258 = vmul.u32 %v252, %v254
    %v259 = vshll.u32 %v256, 16
    %v260 = vshrl.u32 %v256, 16
    %v261 = vshll.u32 %v257, 16
    %v262 = vshrl.u32 %v257, 16
    %vm263 = vc.u32 %v255, %v259
    %v264 = vsel %vm263, 1, 0
    %v265 = vadd.s32 %v255, %v259
    %v266 = vadd.s32 %v258, %v264
    %vm267 = vc.u32 %v265, %v261
    %v268 = vsel %vm267, 1, 0
    %v269 = vadd.s32 %v265, %v261
    %v270 = vadd.s32 %v266, %v268
    %v271 = vadd.s32 %v270, %v260
    %v272 = vadd.s32 %v271, %v262
    %v273 = vmul.u32 %v228, %v219
    %v274 = vadd.s32 %v250, %v269
    %vm275 = vc.u32 %v250, %v269
    %v276 = vadd.s32 %v272, 1
    %v277 = vsel %vm275, %v276, %v272
    %v278 = vadd.s32 %v273, %v277
    %v279 = vadd.s32 %v278, 536870912
    %v280 = vshrl.u32 %v279, 30
    %v281 = vshll.u32 %v280, 30
    %v282 = vsub.s32 %v278, %v281
    %vm283 = vcmp.lt.s32.totalorder %v282, 0
    %v284 = vsub.s32 0, %v282
    %v285 = vsel %vm283, %v284, %v282
    %v286 = vclz %v285
    %v287 = vsub.s32 %v286, 2
    %vm288 = vcmp.gt.s32.totalorder 0, %v287
    %v289 = vsel %vm288, 0, %v287
    %v290 = vsub.s32 32, %v289
    %v291 = vshll.u32 %v282, %v289
    %v292 = vshrl.u32 %v274, %v290
    %v293 = vor.u32 %v291, %v292
    %v294 = vsub.s32 4294967266, %v289
    %v295 = vadd.s32 %v294, 127
    %v296 = vshll.u32 %v295, 23
    %v297 = vor.u32 4788187, %v296
    %v298 = vand.u32 2147483647, %v297
    %v300 = vcvt.s32.f32 %v293
    %v301 = vmul.f32 %v300, %v298
    %v302 = vxor.u32 %v301, 2147483648
    %v303 = vsel %vm182, %v302, %v301
    %v304 = vsub.s32 4, %v280
    %v305 = vsel %vm182, %v304, %v280
    %v306 = vsel %vm181, %v22, %v303
    %v307 = vsel %vm181, 0, %v305
    %v308 = vmul.f32 %v306, %v306
    %v309 = vmul.f32 %v308, -0.001358992
    %v310 = vadd.f32 %v309, 0.041655596
    %v311 = vmul.f32 %v308, %v310
    %v312 = vadd.f32 %v311, -0.4999988
    %v313 = vmul.f32 %v308, %v312
    %v314 = vadd.f32 1.0, %v313
    %v315 = vmul.f32 %v306, %v306
    %v316 = vmul.f32 %v315, -0.00019511016
    %v317 = vadd.f32 %v316, 0.008332121
    %v318 = vmul.f32 %v315, %v317
    %v319 = vadd.f32 %v318, -0.16666654
    %v320 = vmul.f32 %v315, %v319
    %v321 = vadd.f32 %v320, 1.0
    %v322 = vmul.f32 %v321, %v306
    %vm323 = vweird.f32 %v22
    %v324 = vand.u32 %v307, 3
    %vm325 = vcmp.lt.s32.totalorder %v324, 2
    %vm326 = vcmp.eq.s32.totalorder %v324, 0
    %v327 = vxor.u32 %v322, 2147483648
    %v328 = vsel %vm326, %v314, %v327
    %vm329 = vcmp.eq.s32.totalorder %v324, 2
    %v330 = vxor.u32 %v314, 2147483648
    %v331 = vsel %vm329, %v330, %v322
    %v332 = vsel %vm325, %v328, %v331
    %v333 = vsel %vm323, nan, %v332
    %334 = vst.msk [vmem:[%s1 + $0x3] sm:$0x7] %vm23, %v179
    %335 = vst.msk [vmem:[%s1 + $0x6] sm:$0x7] %vm23, %v333
    %v336 = vmul.f32 %v179, 2.0
    %v337 = vmul.f32 %v336, %v333
    %v338 = vsub.f32 %v333, %v179
    %v339 = vadd.f32 %v333, %v179
    %v340 = vmul.f32 %v338, %v339
    %341 = vst.msk [vmem:[%s1 + $0x9] sm:$0x7] %vm23, %v337
    %342 = vst.msk [vmem:[%s1 + $0xc] sm:$0x7] %vm23, %v340
    %v343 = vmul.f32 %v22, 4.0
    %v344 = vand.u32 2147483647, %v343
    %vm345 = vcmp.le.f32.partialorder %v344, 0.7853982
    %vm346 = vcmp.lt.s32.totalorder %v343, 0
    %v347 = vand.u32 %v343, 2139095040
    %v348 = vshrl.u32 %v347, 23
    %v349 = vsub.s32 %v348, 127
    %v350 = vand.u32 2147483647, %v343
    %v351 = vand.u32 %v350, 8388607
    %v352 = vor.u32 %v351, 8388608
    %v353 = vsub.s32 0, %v352
    %v354 = vadd.s32 %v349, 1
    %vm355 = vcmp.gt.s32.totalorder %v354, 0
    %v356 = vsel %vm355, %v354, 0
    %v357 = vshrl.u32 %v356, 5
    %v358 = vand.u32 %v356, 31
    %v359 = vsub.s32 32, %v358
    %v360 = vshrl.u32 683565275, %v359
    %v361 = vshll.u32 683565275, %v358
    %v362 = vshrl.u32 2475754826, %v359
    %v363 = vor.u32 %v361, %v362
    %v364 = vshll.u32 2475754826, %v358
    %v365 = vshrl.u32 2131351028, %v359
    %v366 = vor.u32 %v364, %v365
    %v367 = vshll.u32 2131351028, %v358
    %v368 = vshrl.u32 2102212464, %v359
    %v369 = vor.u32 %v367, %v368
    %v370 = vshll.u32 2102212464, %v358
    %v371 = vshrl.u32 920167782, %v359
    %v372 = vor.u32 %v370, %v371
    %v373 = vshll.u32 920167782, %v358
    %v374 = vshrl.u32 1326507024, %v359
    %v375 = vor.u32 %v373, %v374
    %vm376 = vcmp.lt.s32.totalorder %v357, 1
    %vm377 = vcmp.lt.s32.totalorder %v357, 2
    %vm378 = vcmp.lt.s32.totalorder %v357, 3
    %vm379 = vcmp.lt.s32.totalorder %v357, 4
    %v380 = vsel %vm376, %v360, %v363
    %v381 = vsel %vm379, %v369, 2102212464
    %v382 = vsel %vm378, %v366, %v381
    %v383 = vsel %vm377, %v380, %v382
    %v384 = vsel %vm376, %v363, %v366
    %v385 = vsel %vm379, %v372, 920167782
    %v386 = vsel %vm378, %v369, %v385
    %v387 = vsel %vm377, %v384, %v386
    %v388 = vsel %vm376, %v366, %v369
    %v389 = vsel %vm379, %v375, 1326507024
    %v390 = vsel %vm378, %v372, %v389
    %v391 = vsel %vm377, %v388, %v390
    %v392 = vshll.u32 %v352, 8
    %v393 = vand.u32 %v392, 65535
    %v394 = vshrl.u32 %v392, 16
    %v395 = vand.u32 %v391, 65535
    %v396 = vshrl.u32 %v391, 16
    %v397 = vmul.u32 %v393, %v395
    %v398 = vmul.u32 %v393, %v396
    %v399 = vmul.u32 %v394, %v395
    %v400 = vmul.u32 %v394, %v396
    %v401 = vshll.u32 %v398, 16
    %v402 = vshrl.u32 %v398, 16
    %v403 = vshll.u32 %v399, 16
    %v404 = vshrl.u32 %v399, 16
    %vm405 = vc.u32 %v397, %v401
    %v406 = vsel %vm405, 1, 0
    %v407 = vadd.s32 %v397, %v401
    %v408 = vadd.s32 %v400, %v406
    %vm409 = vc.u32 %v407, %v403
    %v410 = vsel %vm409, 1, 0
    %v411 = vadd.s32 %v407, %v403
    %v412 = vadd.s32 %v408, %v410
    %v413 = vadd.s32 %v412, %v402
    %v414 = vadd.s32 %v413, %v404
    %v415 = vand.u32 %v392, 65535
    %v416 = vshrl.u32 %v392, 16
    %v417 = vand.u32 %v387, 65535
    %v418 = vshrl.u32 %v387, 16
    %v419 = vmul.u32 %v415, %v417
    %v420 = vmul.u32 %v415, %v418
    %v421 = vmul.u32 %v416, %v417
    %v422 = vmul.u32 %v416, %v418
    %v423 = vshll.u32 %v420, 16
    %v424 = vshrl.u32 %v420, 16
    %v425 = vshll.u32 %v421, 16
    %v426 = vshrl.u32 %v421, 16
    %vm427 = vc.u32 %v419, %v423
    %v428 = vsel %vm427, 1, 0
    %v429 = vadd.s32 %v419, %v423
    %v430 = vadd.s32 %v422, %v428
    %vm431 = vc.u32 %v429, %v425
    %v432 = vsel %vm431, 1, 0
    %v433 = vadd.s32 %v429, %v425
    %v434 = vadd.s32 %v430, %v432
    %v435 = vadd.s32 %v434, %v424
    %v436 = vadd.s32 %v435, %v426
    %v437 = vmul.u32 %v392, %v383
    %v438 = vadd.s32 %v414, %v433
    %vm439 = vc.u32 %v414, %v433
    %v440 = vadd.s32 %v436, 1
    %v441 = vsel %vm439, %v440, %v436
    %v442 = vadd.s32 %v437, %v441
    %v443 = vadd.s32 %v442, 536870912
    %v444 = vshrl.u32 %v443, 30
    %v445 = vshll.u32 %v444, 30
    %v446 = vsub.s32 %v442, %v445
    %vm447 = vcmp.lt.s32.totalorder %v446, 0
    %v448 = vsub.s32 0, %v446
    %v449 = vsel %vm447, %v448, %v446
    %v450 = vclz %v449
    %v451 = vsub.s32 %v450, 2
    %vm452 = vcmp.gt.s32.totalorder 0, %v451
    %v453 = vsel %vm452, 0, %v451
    %v454 = vsub.s32 32, %v453
    %v455 = vshll.u32 %v446, %v453
    %v456 = vshrl.u32 %v438, %v454
    %v457 = vor.u32 %v455, %v456
    %v458 = vsub.s32 4294967266, %v453
    %v459 = vadd.s32 %v458, 127
    %v460 = vshll.u32 %v459, 23
    %v461 = vor.u32 4788187, %v460
    %v462 = vand.u32 2147483647, %v461
    %v464 = vcvt.s32.f32 %v457
    %v465 = vmul.f32 %v464, %v462
    %v466 = vxor.u32 %v465, 2147483648
    %v467 = vsel %vm346, %v466, %v465
    %v468 = vsub.s32 4, %v444
    %v469 = vsel %vm346, %v468, %v444
    %v470 = vsel %vm345, %v343, %v467
    %v471 = vsel %vm345, 0, %v469
    %v472 = vmul.f32 %v470, %v470
    %v473 = vmul.f32 %v472, -0.001358992
    %v474 = vadd.f32 %v473, 0.041655596
    %v475 = vmul.f32 %v472, %v474
    %v476 = vadd.f32 %v475, -0.4999988
    %v477 = vmul.f32 %v472, %v476
    %v478 = vadd.f32 1.0, %v477
    %v479 = vmul.f32 %v470, %v470
    %v480 = vmul.f32 %v479, -0.00019511016
    %v481 = vadd.f32 %v480, 0.008332121
    %v482 = vmul.f32 %v479, %v481
    %v483 = vadd.f32 %v482, -0.16666654
    %v484 = vmul.f32 %v479, %v483
    %v485 = vadd.f32 %v484, 1.0
    %v486 = vmul.f32 %v485, %v470
    %vm487 = vweird.f32 %v343
    %v488 = vadd.s32 %v471, 3
    %v489 = vand.u32 %v488, 3
    %vm490 = vcmp.lt.s32.totalorder %v489, 2
    %vm491 = vcmp.eq.s32.totalorder %v489, 0
    %v492 = vxor.u32 %v486, 2147483648
    %v493 = vsel %vm491, %v478, %v492
    %vm494 = vcmp.eq.s32.totalorder %v489, 2
    %v495 = vxor.u32 %v478, 2147483648
    %v496 = vsel %vm494, %v495, %v486
    %v497 = vsel %vm490, %v493, %v496
    %v498 = vsel %vm487, nan, %v497
    %v499 = vand.u32 2147483647, %v343
    %vm500 = vcmp.le.f32.partialorder %v499, 0.7853982
    %vm501 = vcmp.lt.s32.totalorder %v343, 0
    %v502 = vand.u32 %v343, 2139095040
    %v503 = vshrl.u32 %v502, 23
    %v504 = vsub.s32 %v503, 127
    %v505 = vand.u32 2147483647, %v343
    %v506 = vand.u32 %v505, 8388607
    %v507 = vor.u32 %v506, 8388608
    %v508 = vsub.s32 0, %v507
    %v509 = vadd.s32 %v504, 1
    %vm510 = vcmp.gt.s32.totalorder %v509, 0
    %v511 = vsel %vm510, %v509, 0
    %v512 = vshrl.u32 %v511, 5
    %v513 = vand.u32 %v511, 31
    %v514 = vsub.s32 32, %v513
    %v515 = vshrl.u32 683565275, %v514
    %v516 = vshll.u32 683565275, %v513
    %v517 = vshrl.u32 2475754826, %v514
    %v518 = vor.u32 %v516, %v517
    %v519 = vshll.u32 2475754826, %v513
    %v520 = vshrl.u32 2131351028, %v514
    %v521 = vor.u32 %v519, %v520
    %v522 = vshll.u32 2131351028, %v513
    %v523 = vshrl.u32 2102212464, %v514
    %v524 = vor.u32 %v522, %v523
    %v525 = vshll.u32 2102212464, %v513
    %v526 = vshrl.u32 920167782, %v514
    %v527 = vor.u32 %v525, %v526
    %v528 = vshll.u32 920167782, %v513
    %v529 = vshrl.u32 1326507024, %v514
    %v530 = vor.u32 %v528, %v529
    %vm531 = vcmp.lt.s32.totalorder %v512, 1
    %vm532 = vcmp.lt.s32.totalorder %v512, 2
    %vm533 = vcmp.lt.s32.totalorder %v512, 3
    %vm534 = vcmp.lt.s32.totalorder %v512, 4
    %v535 = vsel %vm531, %v515, %v518
    %v536 = vsel %vm534, %v524, 2102212464
    %v537 = vsel %vm533, %v521, %v536
    %v538 = vsel %vm532, %v535, %v537
    %v539 = vsel %vm531, %v518, %v521
    %v540 = vsel %vm534, %v527, 920167782
    %v541 = vsel %vm533, %v524, %v540
    %v542 = vsel %vm532, %v539, %v541
    %v543 = vsel %vm531, %v521, %v524
    %v544 = vsel %vm534, %v530, 1326507024
    %v545 = vsel %vm533, %v527, %v544
    %v546 = vsel %vm532, %v543, %v545
    %v547 = vshll.u32 %v507, 8
    %v548 = vand.u32 %v547, 65535
    %v549 = vshrl.u32 %v547, 16
    %v550 = vand.u32 %v546, 65535
    %v551 = vshrl.u32 %v546, 16
    %v552 = vmul.u32 %v548, %v550
    %v553 = vmul.u32 %v548, %v551
    %v554 = vmul.u32 %v549, %v550
    %v555 = vmul.u32 %v549, %v551
    %v556 = vshll.u32 %v553, 16
    %v557 = vshrl.u32 %v553, 16
    %v558 = vshll.u32 %v554, 16
    %v559 = vshrl.u32 %v554, 16
    %vm560 = vc.u32 %v552, %v556
    %v561 = vsel %vm560, 1, 0
    %v562 = vadd.s32 %v552, %v556
    %v563 = vadd.s32 %v555, %v561
    %vm564 = vc.u32 %v562, %v558
    %v565 = vsel %vm564, 1, 0
    %v566 = vadd.s32 %v562, %v558
    %v567 = vadd.s32 %v563, %v565
    %v568 = vadd.s32 %v567, %v557
    %v569 = vadd.s32 %v568, %v559
    %v570 = vand.u32 %v547, 65535
    %v571 = vshrl.u32 %v547, 16
    %v572 = vand.u32 %v542, 65535
    %v573 = vshrl.u32 %v542, 16
    %v574 = vmul.u32 %v570, %v572
    %v575 = vmul.u32 %v570, %v573
    %v576 = vmul.u32 %v571, %v572
    %v577 = vmul.u32 %v571, %v573
    %v578 = vshll.u32 %v575, 16
    %v579 = vshrl.u32 %v575, 16
    %v580 = vshll.u32 %v576, 16
    %v581 = vshrl.u32 %v576, 16
    %vm582 = vc.u32 %v574, %v578
    %v583 = vsel %vm582, 1, 0
    %v584 = vadd.s32 %v574, %v578
    %v585 = vadd.s32 %v577, %v583
    %vm586 = vc.u32 %v584, %v580
    %v587 = vsel %vm586, 1, 0
    %v588 = vadd.s32 %v584, %v580
    %v589 = vadd.s32 %v585, %v587
    %v590 = vadd.s32 %v589, %v579
    %v591 = vadd.s32 %v590, %v581
    %v592 = vmul.u32 %v547, %v538
    %v593 = vadd.s32 %v569, %v588
    %vm594 = vc.u32 %v569, %v588
    %v595 = vadd.s32 %v591, 1
    %v596 = vsel %vm594, %v595, %v591
    %v597 = vadd.s32 %v592, %v596
    %v598 = vadd.s32 %v597, 536870912
    %v599 = vshrl.u32 %v598, 30
    %v600 = vshll.u32 %v599, 30
    %v601 = vsub.s32 %v597, %v600
    %vm602 = vcmp.lt.s32.totalorder %v601, 0
    %v603 = vsub.s32 0, %v601
    %v604 = vsel %vm602, %v603, %v601
    %v605 = vclz %v604
    %v606 = vsub.s32 %v605, 2
    %vm607 = vcmp.gt.s32.totalorder 0, %v606
    %v608 = vsel %vm607, 0, %v606
    %v609 = vsub.s32 32, %v608
    %v610 = vshll.u32 %v601, %v608
    %v611 = vshrl.u32 %v593, %v609
    %v612 = vor.u32 %v610, %v611
    %v613 = vsub.s32 4294967266, %v608
    %v614 = vadd.s32 %v613, 127
    %v615 = vshll.u32 %v614, 23
    %v616 = vor.u32 4788187, %v615
    %v617 = vand.u32 2147483647, %v616
    %v619 = vcvt.s32.f32 %v612
    %v620 = vmul.f32 %v619, %v617
    %v621 = vxor.u32 %v620, 2147483648
    %v622 = vsel %vm501, %v621, %v620
    %v623 = vsub.s32 4, %v599
    %v624 = vsel %vm501, %v623, %v599
    %v625 = vsel %vm500, %v343, %v622
    %v626 = vsel %vm500, 0, %v624
    %v627 = vmul.f32 %v625, %v625
    %v628 = vmul.f32 %v627, -0.001358992
    %v629 = vadd.f32 %v628, 0.041655596
    %v630 = vmul.f32 %v627, %v629
    %v631 = vadd.f32 %v630, -0.4999988
    %v632 = vmul.f32 %v627, %v631
    %v633 = vadd.f32 1.0, %v632
    %v634 = vmul.f32 %v625, %v625
    %v635 = vmul.f32 %v634, -0.00019511016
    %v636 = vadd.f32 %v635, 0.008332121
    %v637 = vmul.f32 %v634, %v636
    %v638 = vadd.f32 %v637, -0.16666654
    %v639 = vmul.f32 %v634, %v638
    %v640 = vadd.f32 %v639, 1.0
    %v641 = vmul.f32 %v640, %v625
    %vm642 = vweird.f32 %v343
    %v643 = vand.u32 %v626, 3
    %vm644 = vcmp.lt.s32.totalorder %v643, 2
    %vm645 = vcmp.eq.s32.totalorder %v643, 0
    %v646 = vxor.u32 %v641, 2147483648
    %v647 = vsel %vm645, %v633, %v646
    %vm648 = vcmp.eq.s32.totalorder %v643, 2
    %v649 = vxor.u32 %v633, 2147483648
    %v650 = vsel %vm648, %v649, %v641
    %v651 = vsel %vm644, %v647, %v650
    %v652 = vsel %vm642, nan, %v651
    %653 = vst.msk [vmem:[%s1 + $0xf] sm:$0x7] %vm23, %v498
    %654 = vst.msk [vmem:[%s1 + $0x12] sm:$0x7] %vm23, %v652
    %v655 = vmul.f32 %v498, 2.0
    %v656 = vmul.f32 %v655, %v652
    %v657 = vsub.f32 %v652, %v498
    %v658 = vadd.f32 %v652, %v498
    %v659 = vmul.f32 %v657, %v658
    %660 = vst.msk [vmem:[%s1 + $0x15] sm:$0x7] %vm23, %v656
    %661 = vst.msk [vmem:[%s1 + $0x18] sm:$0x7] %vm23, %v659
    // Predicated region
    $region10: #{tpu_custom_call.1} parent=1 // pred_check
      _
    $region11: #{tpu_custom_call.1} parent=1 // pred_check_branch
      %663 = sbr.rel (0) target = $region13
    $region12: #{tpu_custom_call.1} parent=1 // pred_region
      _
    $region13: #{tpu_custom_call.1} parent=1 // pred_fallthru
      _
    // Predicated region
    $region14: #{tpu_custom_call.1} parent=1 // pred_check
      _
    $region15: #{tpu_custom_call.1} parent=1 // pred_check_branch
      %665 = sbr.rel (0) target = $region17
    $region16: #{tpu_custom_call.1} parent=1 // pred_region
      _
    $region17: #{tpu_custom_call.1} parent=1 // pred_fallthru
      _
    %666 = vsyncpa [#allocation3], 1

</llo_original>
